<compile_context>
chip_gen: v7x
topology: tpu7x:2x2x1
jax: 0.10.0
libtpu: 0.0.40
codegen_flags: <defaults>
</compile_context>

<pallas_src>
import math
import jax
import jax.numpy as jnp
from jax.experimental import pallas as pl
from jax.experimental.pallas import tpu as pltpu

BN_EPS = 1e-5  # nn.BatchNorm1d default


def mlp_kernel(x_ref, w1_ref, w2_ref, wf_ref, bias_ref, out_ref):
    H1 = w1_ref.shape[1]
    H2 = w2_ref.shape[1]

    # hidden layer 1: (Linear + folded eval-BN) + ReLU   (Dropout = identity in eval)
    x = x_ref[...].astype(jnp.bfloat16)
    h = jnp.dot(x, w1_ref[...], preferred_element_type=jnp.float32)
    h = jnp.maximum(h + bias_ref[:, 0:H1], 0.0).astype(jnp.bfloat16)

    # hidden layer 2: (Linear + folded eval-BN) + ReLU
    h = jnp.dot(h, w2_ref[...], preferred_element_type=jnp.float32)
    h = jnp.maximum(h + bias_ref[:, H1:H1 + H2], 0.0).astype(jnp.bfloat16)

    # final Linear, logit column 1 only: VPU multiply + lane reduction (no padded MXU pass)
    prod = h.astype(jnp.float32) * wf_ref[...].astype(jnp.float32)   # (tile_b, H2)
    logit = jnp.sum(prod, axis=-1, keepdims=True)                    # (tile_b, 1)

    # lane-dense store: final bias (replicated over 128 lanes) + sigmoid, write full slab
    bf = bias_ref[:, H1 + H2:H1 + H2 + 128]                          # (1, 128)
    out_ref[...] = jax.nn.sigmoid(jnp.broadcast_to(logit, out_ref.shape) + bf)


def neural_net_forward(x, params, *, tile_b=None):
    """x: (B, input_size) f32. Returns sigmoid(logits)[:, 1:2] of shape (B, 1)."""
    w1, w2, wf_row, biases = params
    B, input_size = x.shape
    H1 = w1.shape[1]
    H2 = w2.shape[1]
    assert wf_row.shape == (1, H2)
    assert biases.shape == (1, H1 + H2 + 128)

    if tile_b is None:
        # fill the MXU M dim when the batch allows; otherwise a single small tile
        tile_b = 128 if B >= 128 else max(8, ((B + 7) // 8) * 8)
    padded_b = pl.cdiv(B, tile_b) * tile_b
    if padded_b != B:
        x = jnp.pad(x, ((0, padded_b - B), (0, 0)))
    grid = (padded_b // tile_b,)

    out = pl.pallas_call(
        mlp_kernel,
        out_shape=jax.ShapeDtypeStruct((padded_b, 128), jnp.float32),
        grid=grid,
        in_specs=[
            pl.BlockSpec((tile_b, input_size), lambda i: (i, 0)),     # activations: per-tile
            pl.BlockSpec((input_size, H1), lambda i: (0, 0)),         # w1: VMEM-resident
            pl.BlockSpec((H1, H2), lambda i: (0, 0)),                 # w2: VMEM-resident
            pl.BlockSpec((1, H2), lambda i: (0, 0)),                  # final weight row
            pl.BlockSpec((1, H1 + H2 + 128), lambda i: (0, 0)),       # fused bias buffer
        ],
        out_specs=pl.BlockSpec((tile_b, 128), lambda i: (i, 0)),
        compiler_params=pltpu.CompilerParams(
            dimension_semantics=("parallel",),
        ),
    )(x, w1, w2, wf_row, biases)

    return out[:B, :1]


def xavier_uniform(key, out_features, in_features, gain):
    # matches nn.init.xavier_uniform_ on a (out, in) weight
    bound = gain * math.sqrt(6.0 / (in_features + out_features))
    return jax.random.uniform(key, (out_features, in_features), jnp.float32, -bound, bound)


def make_params(key, input_size, hidden_layers):
    """BN-folded, pre-transposed bf16 weights; single fused f32 bias buffer."""
    assert len(hidden_layers) == 2, "kernel is specialized to 2 hidden layers"
    relu_gain = math.sqrt(2.0)  # nn.init.calculate_gain('relu')
    keys = jax.random.split(key, len(hidden_layers) + 1)

    weights = []
    folded_biases = []
    cur = input_size
    for i, h in enumerate(hidden_layers):
        w = xavier_uniform(keys[i], h, cur, relu_gain).T      # (cur, h) pre-transposed
        b = jnp.zeros((h,), jnp.float32)                      # nn.init.zeros_
        # BatchNorm1d defaults: gamma=1, beta=0, running_mean=0, running_var=1
        gamma = jnp.ones((h,), jnp.float32)
        beta = jnp.zeros((h,), jnp.float32)
        r_mean = jnp.zeros((h,), jnp.float32)
        r_var = jnp.ones((h,), jnp.float32)
        scale = gamma * jax.lax.rsqrt(r_var + BN_EPS)
        weights.append((w * scale[None, :]).astype(jnp.bfloat16))     # fold BN scale
        folded_biases.append((b - r_mean) * scale + beta)             # fold BN shift (f32)
        cur = h

    # final layer (cur, 2): keep only the weight row / bias for logit column 1
    wf = xavier_uniform(keys[-1], 2, cur, 1.0).T               # (cur, 2)
    bf = jnp.zeros((2,), jnp.float32)                          # nn.init.zeros_
    wf_row = wf[:, 1].reshape(1, cur).astype(jnp.bfloat16)     # (1, cur)
    bf_block = jnp.full((1, 128), bf[1], jnp.float32)          # scalar replicated over lanes

    biases = jnp.concatenate(
        [folded_biases[0].reshape(1, -1), folded_biases[1].reshape(1, -1), bf_block], axis=1
    )  # (1, H1 + H2 + 128) f32

    w1, w2 = weights
    return w1, w2, wf_row, biases


def reference_forward(x, params):
    """Pure-JAX reference with the same bf16 operand rounding as the kernel."""
    w1, w2, wf_row, biases = params
    H1 = w1.shape[1]
    H2 = w2.shape[1]
    b1 = biases[:, 0:H1]
    b2 = biases[:, H1:H1 + H2]
    bf = biases[0, H1 + H2]

    def dot_bf16(a, w):
        a16 = a.astype(jnp.bfloat16).astype(jnp.float32)
        return jnp.dot(a16, w.astype(jnp.float32))

    h = jnp.maximum(dot_bf16(x, w1) + b1, 0.0)
    h = jnp.maximum(dot_bf16(h, w2) + b2, 0.0)
    h16 = h.astype(jnp.bfloat16).astype(jnp.float32)
    logit = jnp.sum(h16 * wf_row.astype(jnp.float32), axis=-1, keepdims=True) + bf
    return jax.nn.sigmoid(logit)


if __name__ == "__main__":
    input_size = 256
    hidden_layers = (512, 256)   # architecture_options[0]
    batch = 32                   # small demo batch; grid amortizes weights across tiles

    root = jax.random.PRNGKey(0)
    kx, kp = jax.random.split(root)
    x = jax.random.normal(kx, (batch, input_size), jnp.float32)
    params = make_params(kp, input_size, hidden_layers)

    # tile_b=16 -> grid=(2,): weights DMA'd once (constant index_map), reused across tiles
    out = neural_net_forward(x, params, tile_b=16)
    out = jax.block_until_ready(out)

    ref = reference_forward(x, params)
    assert out.shape == (batch, 1), out.shape
    assert jnp.allclose(out, ref, atol=1e-3, rtol=1e-3), "mismatch vs reference"

    print("KERNEL_OK")
</pallas_src>

<mosaic_0001>
module attributes {stable_mosaic.version = 11 : i64} {
  func.func @mlp_kernel(%arg0: i32, %arg1: memref<16x256xf32, #tpu.memory_space<vmem>>, %arg2: memref<256x512xbf16, #tpu.memory_space<vmem>>, %arg3: memref<512x256xbf16, #tpu.memory_space<vmem>>, %arg4: memref<1x256xbf16, #tpu.memory_space<vmem>>, %arg5: memref<1x896xf32, #tpu.memory_space<vmem>>, %arg6: memref<16x128xf32, #tpu.memory_space<vmem>>) attributes {dimension_semantics = [#tpu.dimension_semantics<parallel>], iteration_bounds = array<i64: 2>, scalar_prefetch = 0 : i64, scratch_operands = 0 : i64, tpu.core_type = #tpu.core_type<tc>, window_params = [{transform_indices = @transform_0, window_bounds = array<i64: 16, 256>}, {pipeline_mode = #tpu.pipeline_mode<synchronous>, transform_indices = @transform_1, window_bounds = array<i64: 256, 512>}, {pipeline_mode = #tpu.pipeline_mode<synchronous>, transform_indices = @transform_2, window_bounds = array<i64: 512, 256>}, {pipeline_mode = #tpu.pipeline_mode<synchronous>, transform_indices = @transform_3, window_bounds = array<i64: 1, 256>}, {pipeline_mode = #tpu.pipeline_mode<synchronous>, transform_indices = @transform_4, window_bounds = array<i64: 1, 896>}, {transform_indices = @transform_5, window_bounds = array<i64: 16, 128>}]} {
    %c0 = arith.constant 0 : index
    %c0_0 = arith.constant 0 : index
    %0 = vector.load %arg1[%c0, %c0_0] : memref<16x256xf32, #tpu.memory_space<vmem>>, vector<16x256xf32>
    %1 = arith.truncf %0 : vector<16x256xf32> to vector<16x256xbf16>
    %c0_1 = arith.constant 0 : index
    %c0_2 = arith.constant 0 : index
    %2 = vector.load %arg2[%c0_1, %c0_2] : memref<256x512xbf16, #tpu.memory_space<vmem>>, vector<256x512xbf16>
    %cst = arith.constant dense<0.000000e+00> : vector<16x512xf32>
    %3 = tpu.matmul %1, %2, %cst {dimension_numbers = #tpu.dot_dimension_numbers<[1], [0], [0], [1], [0, 0, 1, 1], [], []>} : vector<16x256xbf16>, vector<256x512xbf16>, vector<16x512xf32> -> vector<16x512xf32>
    %c0_3 = arith.constant 0 : index
    %c0_4 = arith.constant 0 : index
    %4 = vector.load %arg5[%c0_3, %c0_4] : memref<1x896xf32, #tpu.memory_space<vmem>>, vector<1x512xf32>
    %5 = vector.broadcast %4 : vector<1x512xf32> to vector<16x512xf32>
    %6 = arith.addf %3, %5 : vector<16x512xf32>
    %cst_5 = arith.constant 0.000000e+00 : f32
    %7 = vector.broadcast %cst_5 : f32 to vector<16x512xf32>
    %8 = arith.maximumf %6, %7 : vector<16x512xf32>
    %9 = arith.truncf %8 : vector<16x512xf32> to vector<16x512xbf16>
    %c0_6 = arith.constant 0 : index
    %c0_7 = arith.constant 0 : index
    %10 = vector.load %arg3[%c0_6, %c0_7] : memref<512x256xbf16, #tpu.memory_space<vmem>>, vector<512x256xbf16>
    %cst_8 = arith.constant dense<0.000000e+00> : vector<16x256xf32>
    %11 = tpu.matmul %9, %10, %cst_8 {dimension_numbers = #tpu.dot_dimension_numbers<[1], [0], [0], [1], [0, 0, 1, 1], [], []>} : vector<16x512xbf16>, vector<512x256xbf16>, vector<16x256xf32> -> vector<16x256xf32>
    %c0_9 = arith.constant 0 : index
    %c512 = arith.constant 512 : index
    %12 = vector.load %arg5[%c0_9, %c512] : memref<1x896xf32, #tpu.memory_space<vmem>>, vector<1x256xf32>
    %13 = vector.broadcast %12 : vector<1x256xf32> to vector<16x256xf32>
    %14 = arith.addf %11, %13 : vector<16x256xf32>
    %cst_10 = arith.constant 0.000000e+00 : f32
    %15 = vector.broadcast %cst_10 : f32 to vector<16x256xf32>
    %16 = arith.maximumf %14, %15 : vector<16x256xf32>
    %17 = arith.truncf %16 : vector<16x256xf32> to vector<16x256xbf16>
    %18 = arith.extf %17 : vector<16x256xbf16> to vector<16x256xf32>
    %c0_11 = arith.constant 0 : index
    %c0_12 = arith.constant 0 : index
    %19 = vector.load %arg4[%c0_11, %c0_12] : memref<1x256xbf16, #tpu.memory_space<vmem>>, vector<1x256xbf16>
    %20 = arith.extf %19 : vector<1x256xbf16> to vector<1x256xf32>
    %21 = vector.broadcast %20 : vector<1x256xf32> to vector<16x256xf32>
    %22 = arith.mulf %18, %21 : vector<16x256xf32>
    %cst_13 = arith.constant dense<0.000000e+00> : vector<16xf32>
    %23 = vector.multi_reduction <add>, %22, %cst_13 [1] : vector<16x256xf32> to vector<16xf32>
    %24 = vector.shape_cast %23 : vector<16xf32> to vector<16x1xf32>
    %c0_14 = arith.constant 0 : index
    %c768 = arith.constant 768 : index
    %25 = vector.load %arg5[%c0_14, %c768] : memref<1x896xf32, #tpu.memory_space<vmem>>, vector<1x128xf32>
    %26 = vector.shape_cast %24 : vector<16x1xf32> to vector<16x1xf32>
    %27 = vector.broadcast %26 : vector<16x1xf32> to vector<16x128xf32>
    %28 = vector.broadcast %25 : vector<1x128xf32> to vector<16x128xf32>
    %29 = arith.addf %27, %28 : vector<16x128xf32>
    %30 = arith.negf %29 : vector<16x128xf32>
    %31 = math.exp %30 : vector<16x128xf32>
    %cst_15 = arith.constant 1.000000e+00 : f32
    %32 = vector.broadcast %cst_15 : f32 to vector<16x128xf32>
    %33 = arith.addf %32, %31 : vector<16x128xf32>
    %34 = arith.divf %32, %33 : vector<16x128xf32>
    %c0_16 = arith.constant 0 : index
    %c0_17 = arith.constant 0 : index
    %35 = vector.load %arg6[%c0_16, %c0_17] : memref<16x128xf32, #tpu.memory_space<vmem>>, vector<16x128xf32>
    tpu.vector_store %arg6[%c0_16, %c0_17], %34 {strides = array<i32>} : memref<16x128xf32, #tpu.memory_space<vmem>>, vector<16x128xf32>,
    return
  }
  func.func @transform_0(%arg0: i32) -> (i32, i32) {
    %c0_i32 = arith.constant 0 : i32
    %c0_i32_0 = arith.constant 0 : i32
    return %arg0, %c0_i32 : i32, i32
  }
  func.func @transform_1(%arg0: i32) -> (i32, i32) {
    %c0_i32 = arith.constant 0 : i32
    %c0_i32_0 = arith.constant 0 : i32
    %c0_i32_1 = arith.constant 0 : i32
    return %c0_i32, %c0_i32_0 : i32, i32
  }
  func.func @transform_2(%arg0: i32) -> (i32, i32) {
    %c0_i32 = arith.constant 0 : i32
    %c0_i32_0 = arith.constant 0 : i32
    %c0_i32_1 = arith.constant 0 : i32
    return %c0_i32, %c0_i32_0 : i32, i32
  }
  func.func @transform_3(%arg0: i32) -> (i32, i32) {
    %c0_i32 = arith.constant 0 : i32
    %c0_i32_0 = arith.constant 0 : i32
    %c0_i32_1 = arith.constant 0 : i32
    return %c0_i32, %c0_i32_0 : i32, i32
  }
  func.func @transform_4(%arg0: i32) -> (i32, i32) {
    %c0_i32 = arith.constant 0 : i32
    %c0_i32_0 = arith.constant 0 : i32
    %c0_i32_1 = arith.constant 0 : i32
    return %c0_i32, %c0_i32_0 : i32, i32
  }
  func.func @transform_5(%arg0: i32) -> (i32, i32) {
    %c0_i32 = arith.constant 0 : i32
    %c0_i32_0 = arith.constant 0 : i32
    return %arg0, %c0_i32 : i32, i32
  }
}

</mosaic_0001>

<llo_original>
// kernel: tpu_custom_call.1
$region0: #{tpu_custom_call.1}
  #allocation0 [shape = 'u32[]', space=smem, size = 0x4, offset = 0x4, fixed_abs, tag = 'smem constant byte address 0x4 - core index']
  #allocation1 [shape = 'u32[144,128]{1,0:T(1,128)}', space=vmem, size = 0x12000, scoped, tag = 'internal scratch']
  %s0 = inlined_call_operand.hbm [shape: f32[32,256], index: 0, kind: input, shape index: {}]
  %s1 = inlined_call_operand.hbm [shape: bf16[256,512], index: 1, kind: input, shape index: {}]
  %s2 = inlined_call_operand.hbm [shape: bf16[512,256], index: 2, kind: input, shape index: {}]
  %s3 = inlined_call_operand.vmem [shape: bf16[1,256], index: 3, kind: input, shape index: {}]
  %s4 = inlined_call_operand.vmem [shape: f32[1,896], index: 4, kind: input, shape index: {}]
  %s5 = inlined_call_operand.hbm [shape: f32[32,128], index: 5, kind: output, shape index: {}]
  %s6 = sld [smem:[#allocation0]]
  $region65: #{tpu_custom_call.1} parent=0
    _
  %s8 = ssub.s32 1, %s6
  %s9 = scalar_select 0, %s8, %s6
  $region1: #{tpu_custom_call.1} parent=0
    #allocation2 [shape = 'u8[32768]{0}', space=vmem, size = 0x8000, scoped, tag = 'input window, operand 0']
    #allocation3 [shape = 's32[2]{0}', space=sflag, size = 0x8, scoped, tag = 'scoped memory for tpu_custom_call.1']
    #allocation4 [shape = 's32[2]{0}', space=sflag, size = 0x8, scoped, tag = 'scoped memory for tpu_custom_call.1']
    #allocation5 [shape = 'u8[262144]{0}', space=vmem, size = 0x40000, scoped, tag = 'input window, operand 1, single buffered']
    #allocation6 [shape = 's32[1]{0}', space=sflag, size = 0x4, scoped, tag = 'scoped memory for tpu_custom_call.1']
    #allocation7 [shape = 'u8[262144]{0}', space=vmem, size = 0x40000, scoped, tag = 'input window, operand 2, single buffered']
    #allocation8 [shape = 'u8[16384]{0}', space=vmem, size = 0x4000, scoped, tag = 'output window, operand 0']
    %10 = vsyncpa [#allocation3], 0
    %s11 = scalar_lea.sflag [#allocation3], 1
    %12 = vsyncpa %s11, 0
    %13 = vsyncpa [#allocation6], 0
    %14 = vsyncpa [#allocation4], 0
    %s15 = scalar_lea.sflag [#allocation4], 1
    %16 = vsyncpa %s15, 0
    loop: start=0, step=1, limit=4
    $region2: #{tpu_custom_call.1} parent=1 // loop_pre_header
      _
    $region3: #{tpu_custom_call.1} parent=1 // loop_header
      %s18 = sphi 0, %s22
      %p19 = scmp.ge.s32.totalorder %s18, 4
      %s28 = sphi 0, %s30
      %s31 = sphi 0, %s28
      %s32 = sphi 0, %s31
      %s48 = sphi 0, %s32
      %s52 = sphi 0, %s52
      %s54 = sphi 0, %s52
      %s55 = sphi 0, %s54
      %s69 = sphi 0, %s55
      %s73 = sphi 0, %s73
      %s75 = sphi 0, %s73
      %s76 = sphi 0, %s75
      %s90 = sphi 0, %s76
      %s94 = sphi 0, %s94
      %s96 = sphi 0, %s94
      %s97 = sphi 0, %s96
      %s111 = sphi 0, %s97
      %s115 = sphi 0, %s115
      %s117 = sphi 0, %s115
      %s118 = sphi 0, %s117
      %s132 = sphi 0, %s118
      %s138 = sphi 0, %s140
      %s141 = sphi 0, %s138
      %s142 = sphi 0, %s141
      %s158 = sphi 0, %s142
    $region4: #{tpu_custom_call.1} parent=1 // loop_header_branch
      %21 = sbr.rel (%p19) target = $region8
    $region5: #{tpu_custom_call.1} parent=1 // loop_body
      %s23 = ssub.s32 %s18, 1
      %s24 = ssub.s32 %s18, 2
      %s25 = sadd.s32 %s18, 1
      %s26 = ssub.s32 %s18, %s25
      %p27 = scmp.eq.s32.totalorder %s26, 0
      %s29 = sadd.s32 %s28, 1
      %s30 = scalar_select %p27, %s28, %s29
      %p33 = pneg %p27
      %p34 = scmp.eq.s32.totalorder %s18, 1
      %p35 = por %p33, %p34
      %p36 = scmp.ne.s32.totalorder %s28, %s31
      %p37 = scmp.eq.s32.totalorder %s18, 0
      %p38 = por %p36, %p37
      %p39 = scmp.ne.s32.totalorder %s28, %s31
      %p40 = scmp.eq.s32.totalorder %s23, 1
      %p41 = por %p39, %p40
      %p42 = scmp.ne.s32.totalorder %s31, %s32
      %p43 = scmp.eq.s32.totalorder %s23, 0
      %p44 = por %p42, %p43
      %p45 = scmp.ne.s32.totalorder %s31, %s32
      %p46 = scmp.eq.s32.totalorder %s24, 1
      %p47 = por %p45, %p46
      %p49 = scmp.ne.s32.totalorder %s32, %s48
      %p50 = scmp.eq.s32.totalorder %s24, 0
      %p51 = por %p49, %p50
      %s53 = sadd.s32 %s52, 1
      %p56 = scmp.eq.s32.totalorder %s18, 1
      %p57 = scmp.ne.s32.totalorder %s52, %s54
      %p58 = scmp.eq.s32.totalorder %s18, 0
      %p59 = por %p57, %p58
      %p60 = scmp.ne.s32.totalorder %s52, %s54
      %p61 = scmp.eq.s32.totalorder %s23, 1
      %p62 = por %p60, %p61
      %p63 = scmp.ne.s32.totalorder %s54, %s55
      %p64 = scmp.eq.s32.totalorder %s23, 0
      %p65 = por %p63, %p64
      %p66 = scmp.ne.s32.totalorder %s54, %s55
      %p67 = scmp.eq.s32.totalorder %s24, 1
      %p68 = por %p66, %p67
      %p70 = scmp.ne.s32.totalorder %s55, %s69
      %p71 = scmp.eq.s32.totalorder %s24, 0
      %p72 = por %p70, %p71
      %s74 = sadd.s32 %s73, 1
      %p77 = scmp.eq.s32.totalorder %s18, 1
      %p78 = scmp.ne.s32.totalorder %s73, %s75
      %p79 = scmp.eq.s32.totalorder %s18, 0
      %p80 = por %p78, %p79
      %p81 = scmp.ne.s32.totalorder %s73, %s75
      %p82 = scmp.eq.s32.totalorder %s23, 1
      %p83 = por %p81, %p82
      %p84 = scmp.ne.s32.totalorder %s75, %s76
      %p85 = scmp.eq.s32.totalorder %s23, 0
      %p86 = por %p84, %p85
      %p87 = scmp.ne.s32.totalorder %s75, %s76
      %p88 = scmp.eq.s32.totalorder %s24, 1
      %p89 = por %p87, %p88
      %p91 = scmp.ne.s32.totalorder %s76, %s90
      %p92 = scmp.eq.s32.totalorder %s24, 0
      %p93 = por %p91, %p92
      %s95 = sadd.s32 %s94, 1
      %p98 = scmp.eq.s32.totalorder %s18, 1
      %p99 = scmp.ne.s32.totalorder %s94, %s96
      %p100 = scmp.eq.s32.totalorder %s18, 0
      %p101 = por %p99, %p100
      %p102 = scmp.ne.s32.totalorder %s94, %s96
      %p103 = scmp.eq.s32.totalorder %s23, 1
      %p104 = por %p102, %p103
      %p105 = scmp.ne.s32.totalorder %s96, %s97
      %p106 = scmp.eq.s32.totalorder %s23, 0
      %p107 = por %p105, %p106
      %p108 = scmp.ne.s32.totalorder %s96, %s97
      %p109 = scmp.eq.s32.totalorder %s24, 1
      %p110 = por %p108, %p109
      %p112 = scmp.ne.s32.totalorder %s97, %s111
      %p113 = scmp.eq.s32.totalorder %s24, 0
      %p114 = por %p112, %p113
      %s116 = sadd.s32 %s115, 1
      %p119 = scmp.eq.s32.totalorder %s18, 1
      %p120 = scmp.ne.s32.totalorder %s115, %s117
      %p121 = scmp.eq.s32.totalorder %s18, 0
      %p122 = por %p120, %p121
      %p123 = scmp.ne.s32.totalorder %s115, %s117
      %p124 = scmp.eq.s32.totalorder %s23, 1
      %p125 = por %p123, %p124
      %p126 = scmp.ne.s32.totalorder %s117, %s118
      %p127 = scmp.eq.s32.totalorder %s23, 0
      %p128 = por %p126, %p127
      %p129 = scmp.ne.s32.totalorder %s117, %s118
      %p130 = scmp.eq.s32.totalorder %s24, 1
      %p131 = por %p129, %p130
      %p133 = scmp.ne.s32.totalorder %s118, %s132
      %p134 = scmp.eq.s32.totalorder %s24, 0
      %p135 = por %p133, %p134
      %s136 = ssub.s32 %s18, %s25
      %p137 = scmp.eq.s32.totalorder %s136, 0
      %s139 = sadd.s32 %s138, 1
      %s140 = scalar_select %p137, %s138, %s139
      %p143 = pneg %p137
      %p144 = scmp.eq.s32.totalorder %s18, 1
      %p145 = por %p143, %p144
      %p146 = scmp.ne.s32.totalorder %s138, %s141
      %p147 = scmp.eq.s32.totalorder %s18, 0
      %p148 = por %p146, %p147
      %p149 = scmp.ne.s32.totalorder %s138, %s141
      %p150 = scmp.eq.s32.totalorder %s23, 1
      %p151 = por %p149, %p150
      %p152 = scmp.ne.s32.totalorder %s141, %s142
      %p153 = scmp.eq.s32.totalorder %s23, 0
      %p154 = por %p152, %p153
      %p155 = scmp.ne.s32.totalorder %s141, %s142
      %p156 = scmp.eq.s32.totalorder %s24, 1
      %p157 = por %p155, %p156
      %p159 = scmp.ne.s32.totalorder %s142, %s158
      %p160 = scmp.eq.s32.totalorder %s24, 0
      %p161 = por %p159, %p160
      %p162 = scmp.le.s32.totalorder 1, %s18
      %p163 = scmp.lt.s32.totalorder %s18, 3
      %p164 = pnand %p162, %p163
      %p165 = pneg %p164
      // Predicated region
      $region9: #{tpu_custom_call.1} parent=5 // pred_check
        _
      $region10: #{tpu_custom_call.1} parent=5 // pred_check_branch
        %167 = sbr.rel (%p164) target = $region12
      $region11: #{tpu_custom_call.1} parent=5 // pred_region
        %s168 = ssub.s32 %s18, 1
        // Predicated region
        $region13: #{tpu_custom_call.1} parent=11 // pred_check
          %p169 = pneg %p65
        $region14: #{tpu_custom_call.1} parent=11 // pred_check_branch
          %171 = sbr.rel (%p169) target = $region16
        $region15: #{tpu_custom_call.1} parent=11 // pred_region
          %s173 = ssub.s32 8192, 8192
          %174 = vsyncadd [#allocation6], %s173
          %s175 = sshll.u32 [#allocation5], 4
          %s176 = int_to_ptr.vmem [resolvable:$true] %s175
          %181 = dma.hbm_to_vmem [thread:$0]  %s1, 8192, %s176, [#allocation6], 256, 256, 16
        $region16: #{tpu_custom_call.1} parent=11 // pred_fallthru
          _
        // Predicated region
        $region17: #{tpu_custom_call.1} parent=11 // pred_check
          %p182 = pneg %p86
        $region18: #{tpu_custom_call.1} parent=11 // pred_check_branch
          %184 = sbr.rel (%p182) target = $region20
        $region19: #{tpu_custom_call.1} parent=11 // pred_region
          %s186 = ssub.s32 8192, 8192
          %187 = vsyncadd [#allocation6], %s186
          %s188 = sshll.u32 [#allocation7], 4
          %s189 = int_to_ptr.vmem [resolvable:$true] %s188
          %194 = dma.hbm_to_vmem [thread:$0]  %s2, 8192, %s189, [#allocation6], 128, 128, 8
        $region20: #{tpu_custom_call.1} parent=11 // pred_fallthru
          _
        // Predicated region
        $region21: #{tpu_custom_call.1} parent=11 // pred_check
          %p195 = pneg %p107
        $region22: #{tpu_custom_call.1} parent=11 // pred_check_branch
          %197 = sbr.rel (%p195) target = $region24
        $region23: #{tpu_custom_call.1} parent=11 // pred_region
          _
        $region24: #{tpu_custom_call.1} parent=11 // pred_fallthru
          _
        // Predicated region
        $region25: #{tpu_custom_call.1} parent=11 // pred_check
          %p198 = pneg %p128
        $region26: #{tpu_custom_call.1} parent=11 // pred_check_branch
          %200 = sbr.rel (%p198) target = $region28
        $region27: #{tpu_custom_call.1} parent=11 // pred_region
          _
        $region28: #{tpu_custom_call.1} parent=11 // pred_fallthru
          _
      $region12: #{tpu_custom_call.1} parent=5 // pred_fallthru
        _
      %p201 = scmp.lt.s32.totalorder %s18, 2
      // Predicated region
      $region29: #{tpu_custom_call.1} parent=5 // pred_check
        %p202 = pneg %p201
      $region30: #{tpu_custom_call.1} parent=5 // pred_check_branch
        %204 = sbr.rel (%p202) target = $region32
      $region31: #{tpu_custom_call.1} parent=5 // pred_region
        // Predicated region
        $region33: #{tpu_custom_call.1} parent=31 // pred_check
          %p205 = pneg %p38
        $region34: #{tpu_custom_call.1} parent=31 // pred_check_branch
          %207 = sbr.rel (%p205) target = $region36
        $region35: #{tpu_custom_call.1} parent=31 // pred_region
          %s208 = sand.u32 %s28, 1
          %s209 = scalar_lea.sflag [#allocation3], %s208
          %s210 = sand.u32 %s28, 1
          %s211 = smul.addr %s210, 32
          %s212 = scalar_lea.vmem [#allocation2], %s211
          %s213 = smul.u32 2, %s18
          %s215 = ssub.s32 512, 512
          %216 = vsyncadd %s209, %s215
          %s217 = smul.addr %s213, 2
          %s218 = smul.addr %s217, 128
          %s219 = scalar_lea.hbm %s0, %s218
          %s220 = sshll.u32 %s212, 4
          %s221 = int_to_ptr.vmem [resolvable:$true] %s220
          %226 = dma.hbm_to_vmem [thread:$0]  %s219, 512, %s221, %s209, 256, 256, 16
        $region36: #{tpu_custom_call.1} parent=31 // pred_fallthru
          _
      $region32: #{tpu_custom_call.1} parent=5 // pred_fallthru
        _
      %p227 = scmp.le.s32.totalorder 1, %s18
      %p228 = scmp.lt.s32.totalorder %s18, 3
      %p229 = pnand %p227, %p228
      %p230 = pneg %p229
      // Predicated region
      $region37: #{tpu_custom_call.1} parent=5 // pred_check
        _
      $region38: #{tpu_custom_call.1} parent=5 // pred_check_branch
        %232 = sbr.rel (%p229) target = $region40
      $region39: #{tpu_custom_call.1} parent=5 // pred_region
        %s233 = ssub.s32 %s18, 1
        %s234 = sand.u32 %s31, 1
        %s235 = scalar_lea.sflag [#allocation3], %s234
        %s236 = sand.u32 %s31, 1
        %s237 = smul.addr %s236, 32
        %s238 = scalar_lea.vmem [#allocation2], %s237
        // Predicated region
        $region41: #{tpu_custom_call.1} parent=39 // pred_check
          %p239 = pneg %p44
        $region42: #{tpu_custom_call.1} parent=39 // pred_check_branch
          %241 = sbr.rel (%p239) target = $region44
        $region43: #{tpu_custom_call.1} parent=39 // pred_region
          %242 = dma.done %s235, 512
        $region44: #{tpu_custom_call.1} parent=39 // pred_fallthru
          _
        // Predicated region
        $region45: #{tpu_custom_call.1} parent=39 // pred_check
          %p243 = pneg %p65
        $region46: #{tpu_custom_call.1} parent=39 // pred_check_branch
          %245 = sbr.rel (%p243) target = $region48
        $region47: #{tpu_custom_call.1} parent=39 // pred_region
          %246 = dma.done [#allocation6], 8192
        $region48: #{tpu_custom_call.1} parent=39 // pred_fallthru
          _
        // Predicated region
        $region49: #{tpu_custom_call.1} parent=39 // pred_check
          %p247 = pneg %p86
        $region50: #{tpu_custom_call.1} parent=39 // pred_check_branch
          %249 = sbr.rel (%p247) target = $region52
        $region51: #{tpu_custom_call.1} parent=39 // pred_region
          %250 = dma.done [#allocation6], 8192
        $region52: #{tpu_custom_call.1} parent=39 // pred_fallthru
          _
        %s251 = sand.u32 %s31, 1
        %s252 = scalar_lea.sflag [#allocation3], %s251
        %s253 = sand.u32 %s31, 1
        %s254 = smul.addr %s253, 32
        %s255 = scalar_lea.vmem [#allocation2], %s254
        %p256 = pneg %p44
        %p257 = pneg %p41
        %p258 = pneg %p65
        %p259 = pneg %p62
        %p260 = pneg %p86
        %p261 = pneg %p83
        %p262 = pneg %p107
        %p263 = pneg %p104
        %p264 = pneg %p128
        %p265 = pneg %p125
        %p266 = pneg %p154
        %p267 = pneg %p151
        %s268 = sand.u32 %s141, 1
        %s269 = scalar_lea.sflag [#allocation4], %s268
        %s270 = sand.u32 %s141, 1
        %s271 = smul.addr %s270, 16
        %s272 = scalar_lea.vmem [#allocation8], %s271
        %s273 = smul.u32 2, %s23
        %s274 = smul.u32 2, %s23
        %v275 = vld [vmem:[%s238] sm:$0xff]
        %v276 = vld [vmem:[%s238 + $0x8] sm:$0xff]
        %v277 = vld [vmem:[%s238 + $0x10] sm:$0xff]
        %v278 = vld [vmem:[%s238 + $0x18] sm:$0xff]
        %v279 = vpack.c.bf16 %v277, %v275
        %v280 = vpack.c.bf16 %v278, %v276
        %v281 = vld [vmem:[#allocation5] sm:$0xff]
        %v282 = vld [vmem:[#allocation5 + $0x8] sm:$0xff]
        %v283 = vld [vmem:[#allocation5 + $0x10] sm:$0xff]
        %v284 = vld [vmem:[#allocation5 + $0x18] sm:$0xff]
        %v285 = vld [vmem:[#allocation5 + $0x20] sm:$0xff]
        %v286 = vld [vmem:[#allocation5 + $0x28] sm:$0xff]
        %v287 = vld [vmem:[#allocation5 + $0x30] sm:$0xff]
        %v288 = vld [vmem:[#allocation5 + $0x38] sm:$0xff]
        %v289 = vld [vmem:[#allocation5 + $0x40] sm:$0xff]
        %v290 = vld [vmem:[#allocation5 + $0x48] sm:$0xff]
        %v291 = vld [vmem:[#allocation5 + $0x50] sm:$0xff]
        %v292 = vld [vmem:[#allocation5 + $0x58] sm:$0xff]
        %v293 = vld [vmem:[#allocation5 + $0x60] sm:$0xff]
        %v294 = vld [vmem:[#allocation5 + $0x68] sm:$0xff]
        %v295 = vld [vmem:[#allocation5 + $0x70] sm:$0xff]
        %v296 = vld [vmem:[#allocation5 + $0x78] sm:$0xff]
        %v297 = vld [vmem:[#allocation5 + $0x80] sm:$0xff]
        %v298 = vld [vmem:[#allocation5 + $0x88] sm:$0xff]
        %v299 = vld [vmem:[#allocation5 + $0x90] sm:$0xff]
        %v300 = vld [vmem:[#allocation5 + $0x98] sm:$0xff]
        %v301 = vld [vmem:[#allocation5 + $0xa0] sm:$0xff]
        %v302 = vld [vmem:[#allocation5 + $0xa8] sm:$0xff]
        %v303 = vld [vmem:[#allocation5 + $0xb0] sm:$0xff]
        %v304 = vld [vmem:[#allocation5 + $0xb8] sm:$0xff]
        %v305 = vld [vmem:[#allocation5 + $0xc0] sm:$0xff]
        %v306 = vld [vmem:[#allocation5 + $0xc8] sm:$0xff]
        %v307 = vld [vmem:[#allocation5 + $0xd0] sm:$0xff]
        %v308 = vld [vmem:[#allocation5 + $0xd8] sm:$0xff]
        %v309 = vld [vmem:[#allocation5 + $0xe0] sm:$0xff]
        %v310 = vld [vmem:[#allocation5 + $0xe8] sm:$0xff]
        %v311 = vld [vmem:[#allocation5 + $0xf0] sm:$0xff]
        %v312 = vld [vmem:[#allocation5 + $0xf8] sm:$0xff]
        %v313 = vld [vmem:[#allocation5 + $0x100] sm:$0xff]
        %v314 = vld [vmem:[#allocation5 + $0x108] sm:$0xff]
        %v315 = vld [vmem:[#allocation5 + $0x110] sm:$0xff]
        %v316 = vld [vmem:[#allocation5 + $0x118] sm:$0xff]
        %v317 = vld [vmem:[#allocation5 + $0x120] sm:$0xff]
        %v318 = vld [vmem:[#allocation5 + $0x128] sm:$0xff]
        %v319 = vld [vmem:[#allocation5 + $0x130] sm:$0xff]
        %v320 = vld [vmem:[#allocation5 + $0x138] sm:$0xff]
        %v321 = vld [vmem:[#allocation5 + $0x140] sm:$0xff]
        %v322 = vld [vmem:[#allocation5 + $0x148] sm:$0xff]
        %v323 = vld [vmem:[#allocation5 + $0x150] sm:$0xff]
        %v324 = vld [vmem:[#allocation5 + $0x158] sm:$0xff]
        %v325 = vld [vmem:[#allocation5 + $0x160] sm:$0xff]
        %v326 = vld [vmem:[#allocation5 + $0x168] sm:$0xff]
        %v327 = vld [vmem:[#allocation5 + $0x170] sm:$0xff]
        %v328 = vld [vmem:[#allocation5 + $0x178] sm:$0xff]
        %v329 = vld [vmem:[#allocation5 + $0x180] sm:$0xff]
        %v330 = vld [vmem:[#allocation5 + $0x188] sm:$0xff]
        %v331 = vld [vmem:[#allocation5 + $0x190] sm:$0xff]
        %v332 = vld [vmem:[#allocation5 + $0x198] sm:$0xff]
        %v333 = vld [vmem:[#allocation5 + $0x1a0] sm:$0xff]
        %v334 = vld [vmem:[#allocation5 + $0x1a8] sm:$0xff]
        %v335 = vld [vmem:[#allocation5 + $0x1b0] sm:$0xff]
        %v336 = vld [vmem:[#allocation5 + $0x1b8] sm:$0xff]
        %v337 = vld [vmem:[#allocation5 + $0x1c0] sm:$0xff]
        %v338 = vld [vmem:[#allocation5 + $0x1c8] sm:$0xff]
        %v339 = vld [vmem:[#allocation5 + $0x1d0] sm:$0xff]
        %v340 = vld [vmem:[#allocation5 + $0x1d8] sm:$0xff]
        %v341 = vld [vmem:[#allocation5 + $0x1e0] sm:$0xff]
        %v342 = vld [vmem:[#allocation5 + $0x1e8] sm:$0xff]
        %v343 = vld [vmem:[#allocation5 + $0x1f0] sm:$0xff]
        %v344 = vld [vmem:[#allocation5 + $0x1f8] sm:$0xff]
        %v345 = vld [vmem:[%s4] sm:$0xf]
        %v347 = vlaneseq
        %v348 = vshrl.u32 %v347, 7
        %v349 = vsub.s32 0, %v348
        %v350 = vrot.slane %v345, %v349
        %v351 = vlaneseq
        %v352 = vshrl.u32 %v351, 7
        %v353 = vsub.s32 1, %v352
        %v354 = vrot.slane %v345, %v353
        %v355 = vlaneseq
        %v356 = vshrl.u32 %v355, 7
        %v357 = vsub.s32 2, %v356
        %v358 = vrot.slane %v345, %v357
        %v359 = vlaneseq
        %v360 = vshrl.u32 %v359, 7
        %v361 = vsub.s32 3, %v360
        %v362 = vrot.slane %v345, %v361
        %v431 = vunpack.c.l.b16 %v281
        %v432 = vunpack.c.h.b16 %v281
        %v433 = vunpack.c.l.b16 %v282
        %v434 = vunpack.c.h.b16 %v282
        %v435 = vunpack.c.l.b16 %v283
        %v436 = vunpack.c.h.b16 %v283
        %v437 = vunpack.c.l.b16 %v284
        %v438 = vunpack.c.h.b16 %v284
        %v439 = vunpack.c.l.b16 %v285
        %v440 = vunpack.c.h.b16 %v285
        %v441 = vunpack.c.l.b16 %v286
        %v442 = vunpack.c.h.b16 %v286
        %v443 = vunpack.c.l.b16 %v287
        %v444 = vunpack.c.h.b16 %v287
        %v445 = vunpack.c.l.b16 %v288
        %v446 = vunpack.c.h.b16 %v288
        %v447 = vunpack.c.l.b16 %v289
        %v448 = vunpack.c.h.b16 %v289
        %v449 = vunpack.c.l.b16 %v290
        %v450 = vunpack.c.h.b16 %v290
        %v451 = vunpack.c.l.b16 %v291
        %v452 = vunpack.c.h.b16 %v291
        %v453 = vunpack.c.l.b16 %v292
        %v454 = vunpack.c.h.b16 %v292
        %v455 = vunpack.c.l.b16 %v293
        %v456 = vunpack.c.h.b16 %v293
        %v457 = vunpack.c.l.b16 %v294
        %v458 = vunpack.c.h.b16 %v294
        %v459 = vunpack.c.l.b16 %v295
        %v460 = vunpack.c.h.b16 %v295
        %v461 = vunpack.c.l.b16 %v296
        %v462 = vunpack.c.h.b16 %v296
        %v463 = vunpack.c.l.b16 %v297
        %v464 = vunpack.c.h.b16 %v297
        %v465 = vunpack.c.l.b16 %v298
        %v466 = vunpack.c.h.b16 %v298
        %v467 = vunpack.c.l.b16 %v299
        %v468 = vunpack.c.h.b16 %v299
        %v469 = vunpack.c.l.b16 %v300
        %v470 = vunpack.c.h.b16 %v300
        %v471 = vunpack.c.l.b16 %v301
        %v472 = vunpack.c.h.b16 %v301
        %v473 = vunpack.c.l.b16 %v302
        %v474 = vunpack.c.h.b16 %v302
        %v475 = vunpack.c.l.b16 %v303
        %v476 = vunpack.c.h.b16 %v303
        %v477 = vunpack.c.l.b16 %v304
        %v478 = vunpack.c.h.b16 %v304
        %v479 = vunpack.c.l.b16 %v305
        %v480 = vunpack.c.h.b16 %v305
        %v481 = vunpack.c.l.b16 %v306
        %v482 = vunpack.c.h.b16 %v306
        %v483 = vunpack.c.l.b16 %v307
        %v484 = vunpack.c.h.b16 %v307
        %v485 = vunpack.c.l.b16 %v308
        %v486 = vunpack.c.h.b16 %v308
        %v487 = vunpack.c.l.b16 %v309
        %v488 = vunpack.c.h.b16 %v309
        %v489 = vunpack.c.l.b16 %v310
        %v490 = vunpack.c.h.b16 %v310
        %v491 = vunpack.c.l.b16 %v311
        %v492 = vunpack.c.h.b16 %v311
        %v493 = vunpack.c.l.b16 %v312
        %v494 = vunpack.c.h.b16 %v312
        %v495 = vunpack.c.l.b16 %v313
        %v496 = vunpack.c.h.b16 %v313
        %v497 = vunpack.c.l.b16 %v314
        %v498 = vunpack.c.h.b16 %v314
        %v499 = vunpack.c.l.b16 %v315
        %v500 = vunpack.c.h.b16 %v315
        %v501 = vunpack.c.l.b16 %v316
        %v502 = vunpack.c.h.b16 %v316
        %v503 = vunpack.c.l.b16 %v317
        %v504 = vunpack.c.h.b16 %v317
        %v505 = vunpack.c.l.b16 %v318
        %v506 = vunpack.c.h.b16 %v318
        %v507 = vunpack.c.l.b16 %v319
        %v508 = vunpack.c.h.b16 %v319
        %v509 = vunpack.c.l.b16 %v320
        %v510 = vunpack.c.h.b16 %v320
        %v511 = vunpack.c.l.b16 %v321
        %v512 = vunpack.c.h.b16 %v321
        %v513 = vunpack.c.l.b16 %v322
        %v514 = vunpack.c.h.b16 %v322
        %v515 = vunpack.c.l.b16 %v323
        %v516 = vunpack.c.h.b16 %v323
        %v517 = vunpack.c.l.b16 %v324
        %v518 = vunpack.c.h.b16 %v324
        %v519 = vunpack.c.l.b16 %v325
        %v520 = vunpack.c.h.b16 %v325
        %v521 = vunpack.c.l.b16 %v326
        %v522 = vunpack.c.h.b16 %v326
        %v523 = vunpack.c.l.b16 %v327
        %v524 = vunpack.c.h.b16 %v327
        %v525 = vunpack.c.l.b16 %v328
        %v526 = vunpack.c.h.b16 %v328
        %v527 = vunpack.c.l.b16 %v329
        %v528 = vunpack.c.h.b16 %v329
        %v529 = vunpack.c.l.b16 %v330
        %v530 = vunpack.c.h.b16 %v330
        %v531 = vunpack.c.l.b16 %v331
        %v532 = vunpack.c.h.b16 %v331
        %v533 = vunpack.c.l.b16 %v332
        %v534 = vunpack.c.h.b16 %v332
        %v535 = vunpack.c.l.b16 %v333
        %v536 = vunpack.c.h.b16 %v333
        %v537 = vunpack.c.l.b16 %v334
        %v538 = vunpack.c.h.b16 %v334
        %v539 = vunpack.c.l.b16 %v335
        %v540 = vunpack.c.h.b16 %v335
        %v541 = vunpack.c.l.b16 %v336
        %v542 = vunpack.c.h.b16 %v336
        %v543 = vunpack.c.l.b16 %v337
        %v544 = vunpack.c.h.b16 %v337
        %v545 = vunpack.c.l.b16 %v338
        %v546 = vunpack.c.h.b16 %v338
        %v547 = vunpack.c.l.b16 %v339
        %v548 = vunpack.c.h.b16 %v339
        %v549 = vunpack.c.l.b16 %v340
        %v550 = vunpack.c.h.b16 %v340
        %v551 = vunpack.c.l.b16 %v341
        %v552 = vunpack.c.h.b16 %v341
        %v553 = vunpack.c.l.b16 %v342
        %v554 = vunpack.c.h.b16 %v342
        %v555 = vunpack.c.l.b16 %v343
        %v556 = vunpack.c.h.b16 %v343
        %v557 = vunpack.c.l.b16 %v344
        %v558 = vunpack.c.h.b16 %v344
        %v559 = vpack.c.b16 %v435, %v431
        %v560 = vpack.c.b16 %v436, %v432
        %v561 = vpack.c.b16 %v437, %v433
        %v562 = vpack.c.b16 %v438, %v434
        %v563 = vpack.c.b16 %v443, %v439
        %v564 = vpack.c.b16 %v444, %v440
        %v565 = vpack.c.b16 %v445, %v441
        %v566 = vpack.c.b16 %v446, %v442
        %v567 = vpack.c.b16 %v451, %v447
        %v568 = vpack.c.b16 %v452, %v448
        %v569 = vpack.c.b16 %v453, %v449
        %v570 = vpack.c.b16 %v454, %v450
        %v571 = vpack.c.b16 %v459, %v455
        %v572 = vpack.c.b16 %v460, %v456
        %v573 = vpack.c.b16 %v461, %v457
        %v574 = vpack.c.b16 %v462, %v458
        %v575 = vpack.c.b16 %v467, %v463
        %v576 = vpack.c.b16 %v468, %v464
        %v577 = vpack.c.b16 %v469, %v465
        %v578 = vpack.c.b16 %v470, %v466
        %v579 = vpack.c.b16 %v475, %v471
        %v580 = vpack.c.b16 %v476, %v472
        %v581 = vpack.c.b16 %v477, %v473
        %v582 = vpack.c.b16 %v478, %v474
        %v583 = vpack.c.b16 %v483, %v479
        %v584 = vpack.c.b16 %v484, %v480
        %v585 = vpack.c.b16 %v485, %v481
        %v586 = vpack.c.b16 %v486, %v482
        %v587 = vpack.c.b16 %v491, %v487
        %v588 = vpack.c.b16 %v492, %v488
        %v589 = vpack.c.b16 %v493, %v489
        %v590 = vpack.c.b16 %v494, %v490
        %v591 = vpack.c.b16 %v499, %v495
        %v592 = vpack.c.b16 %v500, %v496
        %v593 = vpack.c.b16 %v501, %v497
        %v594 = vpack.c.b16 %v502, %v498
        %v595 = vpack.c.b16 %v507, %v503
        %v596 = vpack.c.b16 %v508, %v504
        %v597 = vpack.c.b16 %v509, %v505
        %v598 = vpack.c.b16 %v510, %v506
        %v599 = vpack.c.b16 %v515, %v511
        %v600 = vpack.c.b16 %v516, %v512
        %v601 = vpack.c.b16 %v517, %v513
        %v602 = vpack.c.b16 %v518, %v514
        %v603 = vpack.c.b16 %v523, %v519
        %v604 = vpack.c.b16 %v524, %v520
        %v605 = vpack.c.b16 %v525, %v521
        %v606 = vpack.c.b16 %v526, %v522
        %v607 = vpack.c.b16 %v531, %v527
        %v608 = vpack.c.b16 %v532, %v528
        %v609 = vpack.c.b16 %v533, %v529
        %v610 = vpack.c.b16 %v534, %v530
        %v611 = vpack.c.b16 %v539, %v535
        %v612 = vpack.c.b16 %v540, %v536
        %v613 = vpack.c.b16 %v541, %v537
        %v614 = vpack.c.b16 %v542, %v538
        %v615 = vpack.c.b16 %v547, %v543
        %v616 = vpack.c.b16 %v548, %v544
        %v617 = vpack.c.b16 %v549, %v545
        %v618 = vpack.c.b16 %v550, %v546
        %v619 = vpack.c.b16 %v555, %v551
        %v620 = vpack.c.b16 %v556, %v552
        %v621 = vpack.c.b16 %v557, %v553
        %v622 = vpack.c.b16 %v558, %v554
        %687 = vmatprep.subr.bf16.mxu0 %v560
        %688 = vmatpush1.bf16.msra.mxu0 %v559
        %689 = vmatprep.subr.bf16.mxu0 %v564
        %690 = vmatpush1.bf16.msra.mxu0 %v563
        %691 = vmatprep.subr.bf16.mxu0 %v568
        %692 = vmatpush1.bf16.msra.mxu0 %v567
        %693 = vmatprep.subr.bf16.mxu0 %v572
        %694 = vmatpush1.bf16.msra.mxu0 %v571
        %695 = vmatprep.subr.bf16.mxu0 %v576
        %696 = vmatpush1.bf16.msra.mxu0 %v575
        %697 = vmatprep.subr.bf16.mxu0 %v580
        %698 = vmatpush1.bf16.msra.mxu0 %v579
        %699 = vmatprep.subr.bf16.mxu0 %v584
        %700 = vmatpush1.bf16.msra.mxu0 %v583
        %701 = vmatprep.subr.bf16.mxu0 %v588
        %702 = vmatpush1.bf16.msra.mxu0 %v587
        %703 = vmatprep.subr.bf16.mxu0 %v592
        %704 = vmatpush1.bf16.msra.mxu0 %v591
        %705 = vmatprep.subr.bf16.mxu0 %v596
        %706 = vmatpush1.bf16.msra.mxu0 %v595
        %707 = vmatprep.subr.bf16.mxu0 %v600
        %708 = vmatpush1.bf16.msra.mxu0 %v599
        %709 = vmatprep.subr.bf16.mxu0 %v604
        %710 = vmatpush1.bf16.msra.mxu0 %v603
        %711 = vmatprep.subr.bf16.mxu0 %v608
        %712 = vmatpush1.bf16.msra.mxu0 %v607
        %713 = vmatprep.subr.bf16.mxu0 %v612
        %714 = vmatpush1.bf16.msra.mxu0 %v611
        %715 = vmatprep.subr.bf16.mxu0 %v616
        %716 = vmatpush1.bf16.msra.mxu0 %v615
        %717 = vmatprep.subr.bf16.mxu0 %v620
        %718 = vmatpush1.bf16.msra.mxu0 %v619
        %719 = vmatprep.mubr.bf16.mxu0 %v280
        %720 = vmatmul.mubr.bf16.gmra.mrb[0].mxu0 %v279
        %v721 = vpop.f32.mrb[0].mxu0
        %v722 = vadd.f32 %v350, %v721
        %v723 = vpop.f32.mrb[0].mxu0
        %v724 = vadd.f32 %v354, %v723
        %v725 = vpop.f32.mrb[0].mxu0
        %v726 = vadd.f32 %v350, %v725
        %v727 = vpop.f32.mrb[0].mxu0
        %v728 = vadd.f32 %v354, %v727
        %729 = vdwg.mxu0
        %730 = vmatprep.subr.bf16.mxu0 %v562
        %731 = vmatpush1.bf16.msra.mxu0 %v561
        %732 = vmatprep.subr.bf16.mxu0 %v566
        %733 = vmatpush1.bf16.msra.mxu0 %v565
        %734 = vmatprep.subr.bf16.mxu0 %v570
        %735 = vmatpush1.bf16.msra.mxu0 %v569
        %736 = vmatprep.subr.bf16.mxu0 %v574
        %737 = vmatpush1.bf16.msra.mxu0 %v573
        %738 = vmatprep.subr.bf16.mxu0 %v578
        %739 = vmatpush1.bf16.msra.mxu0 %v577
        %740 = vmatprep.subr.bf16.mxu0 %v582
        %741 = vmatpush1.bf16.msra.mxu0 %v581
        %742 = vmatprep.subr.bf16.mxu0 %v586
        %743 = vmatpush1.bf16.msra.mxu0 %v585
        %744 = vmatprep.subr.bf16.mxu0 %v590
        %745 = vmatpush1.bf16.msra.mxu0 %v589
        %746 = vmatprep.subr.bf16.mxu0 %v594
        %747 = vmatpush1.bf16.msra.mxu0 %v593
        %748 = vmatprep.subr.bf16.mxu0 %v598
        %749 = vmatpush1.bf16.msra.mxu0 %v597
        %750 = vmatprep.subr.bf16.mxu0 %v602
        %751 = vmatpush1.bf16.msra.mxu0 %v601
        %752 = vmatprep.subr.bf16.mxu0 %v606
        %753 = vmatpush1.bf16.msra.mxu0 %v605
        %754 = vmatprep.subr.bf16.mxu0 %v610
        %755 = vmatpush1.bf16.msra.mxu0 %v609
        %756 = vmatprep.subr.bf16.mxu0 %v614
        %757 = vmatpush1.bf16.msra.mxu0 %v613
        %758 = vmatprep.subr.bf16.mxu0 %v618
        %759 = vmatpush1.bf16.msra.mxu0 %v617
        %760 = vmatprep.subr.bf16.mxu0 %v622
        %761 = vmatpush1.bf16.msra.mxu0 %v621
        %762 = vmatprep.mubr.bf16.mxu0 %v280
        %763 = vmatmul.mubr.bf16.gmra.mrb[0].mxu0 %v279
        %v764 = vpop.f32.mrb[0].mxu0
        %v765 = vadd.f32 %v358, %v764
        %v766 = vpop.f32.mrb[0].mxu0
        %v767 = vadd.f32 %v362, %v766
        %v768 = vpop.f32.mrb[0].mxu0
        %v769 = vadd.f32 %v358, %v768
        %v770 = vpop.f32.mrb[0].mxu0
        %v771 = vadd.f32 %v362, %v770
        %772 = vdwg.mxu0
        %v773 = vmax.f32 %v722, 0.0
        %v774 = vmax.f32 %v724, 0.0
        %v775 = vmax.f32 %v765, 0.0
        %v776 = vmax.f32 %v767, 0.0
        %v777 = vmax.f32 %v726, 0.0
        %v778 = vmax.f32 %v728, 0.0
        %v779 = vmax.f32 %v769, 0.0
        %v780 = vmax.f32 %v771, 0.0
        %v781 = vpack.c.bf16 %v777, %v773
        %v782 = vpack.c.bf16 %v778, %v774
        %v783 = vpack.c.bf16 %v779, %v775
        %v784 = vpack.c.bf16 %v780, %v776
        %v785 = vld [vmem:[#allocation7] sm:$0xff]
        %v786 = vld [vmem:[#allocation7 + $0x8] sm:$0xff]
        %v787 = vld [vmem:[#allocation7 + $0x10] sm:$0xff]
        %v788 = vld [vmem:[#allocation7 + $0x18] sm:$0xff]
        %v789 = vld [vmem:[#allocation7 + $0x20] sm:$0xff]
        %v790 = vld [vmem:[#allocation7 + $0x28] sm:$0xff]
        %v791 = vld [vmem:[#allocation7 + $0x30] sm:$0xff]
        %v792 = vld [vmem:[#allocation7 + $0x38] sm:$0xff]
        %v793 = vld [vmem:[#allocation7 + $0x40] sm:$0xff]
        %v794 = vld [vmem:[#allocation7 + $0x48] sm:$0xff]
        %v795 = vld [vmem:[#allocation7 + $0x50] sm:$0xff]
        %v796 = vld [vmem:[#allocation7 + $0x58] sm:$0xff]
        %v797 = vld [vmem:[#allocation7 + $0x60] sm:$0xff]
        %v798 = vld [vmem:[#allocation7 + $0x68] sm:$0xff]
        %v799 = vld [vmem:[#allocation7 + $0x70] sm:$0xff]
        %v800 = vld [vmem:[#allocation7 + $0x78] sm:$0xff]
        %v801 = vld [vmem:[#allocation7 + $0x80] sm:$0xff]
        %v802 = vld [vmem:[#allocation7 + $0x88] sm:$0xff]
        %v803 = vld [vmem:[#allocation7 + $0x90] sm:$0xff]
        %v804 = vld [vmem:[#allocation7 + $0x98] sm:$0xff]
        %v805 = vld [vmem:[#allocation7 + $0xa0] sm:$0xff]
        %v806 = vld [vmem:[#allocation7 + $0xa8] sm:$0xff]
        %v807 = vld [vmem:[#allocation7 + $0xb0] sm:$0xff]
        %v808 = vld [vmem:[#allocation7 + $0xb8] sm:$0xff]
        %v809 = vld [vmem:[#allocation7 + $0xc0] sm:$0xff]
        %v810 = vld [vmem:[#allocation7 + $0xc8] sm:$0xff]
        %v811 = vld [vmem:[#allocation7 + $0xd0] sm:$0xff]
        %v812 = vld [vmem:[#allocation7 + $0xd8] sm:$0xff]
        %v813 = vld [vmem:[#allocation7 + $0xe0] sm:$0xff]
        %v814 = vld [vmem:[#allocation7 + $0xe8] sm:$0xff]
        %v815 = vld [vmem:[#allocation7 + $0xf0] sm:$0xff]
        %v816 = vld [vmem:[#allocation7 + $0xf8] sm:$0xff]
        %v817 = vld [vmem:[#allocation7 + $0x100] sm:$0xff]
        %v818 = vld [vmem:[#allocation7 + $0x108] sm:$0xff]
        %v819 = vld [vmem:[#allocation7 + $0x110] sm:$0xff]
        %v820 = vld [vmem:[#allocation7 + $0x118] sm:$0xff]
        %v821 = vld [vmem:[#allocation7 + $0x120] sm:$0xff]
        %v822 = vld [vmem:[#allocation7 + $0x128] sm:$0xff]
        %v823 = vld [vmem:[#allocation7 + $0x130] sm:$0xff]
        %v824 = vld [vmem:[#allocation7 + $0x138] sm:$0xff]
        %v825 = vld [vmem:[#allocation7 + $0x140] sm:$0xff]
        %v826 = vld [vmem:[#allocation7 + $0x148] sm:$0xff]
        %v827 = vld [vmem:[#allocation7 + $0x150] sm:$0xff]
        %v828 = vld [vmem:[#allocation7 + $0x158] sm:$0xff]
        %v829 = vld [vmem:[#allocation7 + $0x160] sm:$0xff]
        %v830 = vld [vmem:[#allocation7 + $0x168] sm:$0xff]
        %v831 = vld [vmem:[#allocation7 + $0x170] sm:$0xff]
        %v832 = vld [vmem:[#allocation7 + $0x178] sm:$0xff]
        %v833 = vld [vmem:[#allocation7 + $0x180] sm:$0xff]
        %v834 = vld [vmem:[#allocation7 + $0x188] sm:$0xff]
        %v835 = vld [vmem:[#allocation7 + $0x190] sm:$0xff]
        %v836 = vld [vmem:[#allocation7 + $0x198] sm:$0xff]
        %v837 = vld [vmem:[#allocation7 + $0x1a0] sm:$0xff]
        %v838 = vld [vmem:[#allocation7 + $0x1a8] sm:$0xff]
        %v839 = vld [vmem:[#allocation7 + $0x1b0] sm:$0xff]
        %v840 = vld [vmem:[#allocation7 + $0x1b8] sm:$0xff]
        %v841 = vld [vmem:[#allocation7 + $0x1c0] sm:$0xff]
        %v842 = vld [vmem:[#allocation7 + $0x1c8] sm:$0xff]
        %v843 = vld [vmem:[#allocation7 + $0x1d0] sm:$0xff]
        %v844 = vld [vmem:[#allocation7 + $0x1d8] sm:$0xff]
        %v845 = vld [vmem:[#allocation7 + $0x1e0] sm:$0xff]
        %v846 = vld [vmem:[#allocation7 + $0x1e8] sm:$0xff]
        %v847 = vld [vmem:[#allocation7 + $0x1f0] sm:$0xff]
        %v848 = vld [vmem:[#allocation7 + $0x1f8] sm:$0xff]
        %v849 = vld [vmem:[%s4 + $0x4] sm:$0x3]
        %v851 = vlaneseq
        %v852 = vshrl.u32 %v851, 7
        %v853 = vsub.s32 0, %v852
        %v854 = vrot.slane %v849, %v853
        %v855 = vlaneseq
        %v856 = vshrl.u32 %v855, 7
        %v857 = vsub.s32 1, %v856
        %v858 = vrot.slane %v849, %v857
        %v925 = vunpack.c.l.b16 %v785
        %v926 = vunpack.c.h.b16 %v785
        %v927 = vunpack.c.l.b16 %v786
        %v928 = vunpack.c.h.b16 %v786
        %v929 = vunpack.c.l.b16 %v787
        %v930 = vunpack.c.h.b16 %v787
        %v931 = vunpack.c.l.b16 %v788
        %v932 = vunpack.c.h.b16 %v788
        %v933 = vunpack.c.l.b16 %v789
        %v934 = vunpack.c.h.b16 %v789
        %v935 = vunpack.c.l.b16 %v790
        %v936 = vunpack.c.h.b16 %v790
        %v937 = vunpack.c.l.b16 %v791
        %v938 = vunpack.c.h.b16 %v791
        %v939 = vunpack.c.l.b16 %v792
        %v940 = vunpack.c.h.b16 %v792
        %v941 = vunpack.c.l.b16 %v793
        %v942 = vunpack.c.h.b16 %v793
        %v943 = vunpack.c.l.b16 %v794
        %v944 = vunpack.c.h.b16 %v794
        %v945 = vunpack.c.l.b16 %v795
        %v946 = vunpack.c.h.b16 %v795
        %v947 = vunpack.c.l.b16 %v796
        %v948 = vunpack.c.h.b16 %v796
        %v949 = vunpack.c.l.b16 %v797
        %v950 = vunpack.c.h.b16 %v797
        %v951 = vunpack.c.l.b16 %v798
        %v952 = vunpack.c.h.b16 %v798
        %v953 = vunpack.c.l.b16 %v799
        %v954 = vunpack.c.h.b16 %v799
        %v955 = vunpack.c.l.b16 %v800
        %v956 = vunpack.c.h.b16 %v800
        %v957 = vunpack.c.l.b16 %v801
        %v958 = vunpack.c.h.b16 %v801
        %v959 = vunpack.c.l.b16 %v802
        %v960 = vunpack.c.h.b16 %v802
        %v961 = vunpack.c.l.b16 %v803
        %v962 = vunpack.c.h.b16 %v803
        %v963 = vunpack.c.l.b16 %v804
        %v964 = vunpack.c.h.b16 %v804
        %v965 = vunpack.c.l.b16 %v805
        %v966 = vunpack.c.h.b16 %v805
        %v967 = vunpack.c.l.b16 %v806
        %v968 = vunpack.c.h.b16 %v806
        %v969 = vunpack.c.l.b16 %v807
        %v970 = vunpack.c.h.b16 %v807
        %v971 = vunpack.c.l.b16 %v808
        %v972 = vunpack.c.h.b16 %v808
        %v973 = vunpack.c.l.b16 %v809
        %v974 = vunpack.c.h.b16 %v809
        %v975 = vunpack.c.l.b16 %v810
        %v976 = vunpack.c.h.b16 %v810
        %v977 = vunpack.c.l.b16 %v811
        %v978 = vunpack.c.h.b16 %v811
        %v979 = vunpack.c.l.b16 %v812
        %v980 = vunpack.c.h.b16 %v812
        %v981 = vunpack.c.l.b16 %v813
        %v982 = vunpack.c.h.b16 %v813
        %v983 = vunpack.c.l.b16 %v814
        %v984 = vunpack.c.h.b16 %v814
        %v985 = vunpack.c.l.b16 %v815
        %v986 = vunpack.c.h.b16 %v815
        %v987 = vunpack.c.l.b16 %v816
        %v988 = vunpack.c.h.b16 %v816
        %v989 = vunpack.c.l.b16 %v817
        %v990 = vunpack.c.h.b16 %v817
        %v991 = vunpack.c.l.b16 %v818
        %v992 = vunpack.c.h.b16 %v818
        %v993 = vunpack.c.l.b16 %v819
        %v994 = vunpack.c.h.b16 %v819
        %v995 = vunpack.c.l.b16 %v820
        %v996 = vunpack.c.h.b16 %v820
        %v997 = vunpack.c.l.b16 %v821
        %v998 = vunpack.c.h.b16 %v821
        %v999 = vunpack.c.l.b16 %v822
        %v1000 = vunpack.c.h.b16 %v822
        %v1001 = vunpack.c.l.b16 %v823
        %v1002 = vunpack.c.h.b16 %v823
        %v1003 = vunpack.c.l.b16 %v824
        %v1004 = vunpack.c.h.b16 %v824
        %v1005 = vunpack.c.l.b16 %v825
        %v1006 = vunpack.c.h.b16 %v825
        %v1007 = vunpack.c.l.b16 %v826
        %v1008 = vunpack.c.h.b16 %v826
        %v1009 = vunpack.c.l.b16 %v827
        %v1010 = vunpack.c.h.b16 %v827
        %v1011 = vunpack.c.l.b16 %v828
        %v1012 = vunpack.c.h.b16 %v828
        %v1013 = vunpack.c.l.b16 %v829
        %v1014 = vunpack.c.h.b16 %v829
        %v1015 = vunpack.c.l.b16 %v830
        %v1016 = vunpack.c.h.b16 %v830
        %v1017 = vunpack.c.l.b16 %v831
        %v1018 = vunpack.c.h.b16 %v831
        %v1019 = vunpack.c.l.b16 %v832
        %v1020 = vunpack.c.h.b16 %v832
        %v1021 = vunpack.c.l.b16 %v833
        %v1022 = vunpack.c.h.b16 %v833
        %v1023 = vunpack.c.l.b16 %v834
        %v1024 = vunpack.c.h.b16 %v834
        %v1025 = vunpack.c.l.b16 %v835
        %v1026 = vunpack.c.h.b16 %v835
        %v1027 = vunpack.c.l.b16 %v836
        %v1028 = vunpack.c.h.b16 %v836
        %v1029 = vunpack.c.l.b16 %v837
        %v1030 = vunpack.c.h.b16 %v837
        %v1031 = vunpack.c.l.b16 %v838
        %v1032 = vunpack.c.h.b16 %v838
        %v1033 = vunpack.c.l.b16 %v839
        %v1034 = vunpack.c.h.b16 %v839
        %v1035 = vunpack.c.l.b16 %v840
        %v1036 = vunpack.c.h.b16 %v840
        %v1037 = vunpack.c.l.b16 %v841
        %v1038 = vunpack.c.h.b16 %v841
        %v1039 = vunpack.c.l.b16 %v842
        %v1040 = vunpack.c.h.b16 %v842
        %v1041 = vunpack.c.l.b16 %v843
        %v1042 = vunpack.c.h.b16 %v843
        %v1043 = vunpack.c.l.b16 %v844
        %v1044 = vunpack.c.h.b16 %v844
        %v1045 = vunpack.c.l.b16 %v845
        %v1046 = vunpack.c.h.b16 %v845
        %v1047 = vunpack.c.l.b16 %v846
        %v1048 = vunpack.c.h.b16 %v846
        %v1049 = vunpack.c.l.b16 %v847
        %v1050 = vunpack.c.h.b16 %v847
        %v1051 = vunpack.c.l.b16 %v848
        %v1052 = vunpack.c.h.b16 %v848
        %v1053 = vpack.c.b16 %v927, %v925
        %v1054 = vpack.c.b16 %v928, %v926
        %v1055 = vpack.c.b16 %v931, %v929
        %v1056 = vpack.c.b16 %v932, %v930
        %v1057 = vpack.c.b16 %v935, %v933
        %v1058 = vpack.c.b16 %v936, %v934
        %v1059 = vpack.c.b16 %v939, %v937
        %v1060 = vpack.c.b16 %v940, %v938
        %v1061 = vpack.c.b16 %v943, %v941
        %v1062 = vpack.c.b16 %v944, %v942
        %v1063 = vpack.c.b16 %v947, %v945
        %v1064 = vpack.c.b16 %v948, %v946
        %v1065 = vpack.c.b16 %v951, %v949
        %v1066 = vpack.c.b16 %v952, %v950
        %v1067 = vpack.c.b16 %v955, %v953
        %v1068 = vpack.c.b16 %v956, %v954
        %v1069 = vpack.c.b16 %v959, %v957
        %v1070 = vpack.c.b16 %v960, %v958
        %v1071 = vpack.c.b16 %v963, %v961
        %v1072 = vpack.c.b16 %v964, %v962
        %v1073 = vpack.c.b16 %v967, %v965
        %v1074 = vpack.c.b16 %v968, %v966
        %v1075 = vpack.c.b16 %v971, %v969
        %v1076 = vpack.c.b16 %v972, %v970
        %v1077 = vpack.c.b16 %v975, %v973
        %v1078 = vpack.c.b16 %v976, %v974
        %v1079 = vpack.c.b16 %v979, %v977
        %v1080 = vpack.c.b16 %v980, %v978
        %v1081 = vpack.c.b16 %v983, %v981
        %v1082 = vpack.c.b16 %v984, %v982
        %v1083 = vpack.c.b16 %v987, %v985
        %v1084 = vpack.c.b16 %v988, %v986
        %v1085 = vpack.c.b16 %v991, %v989
        %v1086 = vpack.c.b16 %v992, %v990
        %v1087 = vpack.c.b16 %v995, %v993
        %v1088 = vpack.c.b16 %v996, %v994
        %v1089 = vpack.c.b16 %v999, %v997
        %v1090 = vpack.c.b16 %v1000, %v998
        %v1091 = vpack.c.b16 %v1003, %v1001
        %v1092 = vpack.c.b16 %v1004, %v1002
        %v1093 = vpack.c.b16 %v1007, %v1005
        %v1094 = vpack.c.b16 %v1008, %v1006
        %v1095 = vpack.c.b16 %v1011, %v1009
        %v1096 = vpack.c.b16 %v1012, %v1010
        %v1097 = vpack.c.b16 %v1015, %v1013
        %v1098 = vpack.c.b16 %v1016, %v1014
        %v1099 = vpack.c.b16 %v1019, %v1017
        %v1100 = vpack.c.b16 %v1020, %v1018
        %v1101 = vpack.c.b16 %v1023, %v1021
        %v1102 = vpack.c.b16 %v1024, %v1022
        %v1103 = vpack.c.b16 %v1027, %v1025
        %v1104 = vpack.c.b16 %v1028, %v1026
        %v1105 = vpack.c.b16 %v1031, %v1029
        %v1106 = vpack.c.b16 %v1032, %v1030
        %v1107 = vpack.c.b16 %v1035, %v1033
        %v1108 = vpack.c.b16 %v1036, %v1034
        %v1109 = vpack.c.b16 %v1039, %v1037
        %v1110 = vpack.c.b16 %v1040, %v1038
        %v1111 = vpack.c.b16 %v1043, %v1041
        %v1112 = vpack.c.b16 %v1044, %v1042
        %v1113 = vpack.c.b16 %v1047, %v1045
        %v1114 = vpack.c.b16 %v1048, %v1046
        %v1115 = vpack.c.b16 %v1051, %v1049
        %v1116 = vpack.c.b16 %v1052, %v1050
        %1181 = vmatprep.subr.bf16.mxu0 %v1054
        %1182 = vmatpush1.bf16.msra.mxu0 %v1053
        %1183 = vmatprep.subr.bf16.mxu0 %v1056
        %1184 = vmatpush1.bf16.msra.mxu0 %v1055
        %1185 = vmatprep.subr.bf16.mxu0 %v1058
        %1186 = vmatpush1.bf16.msra.mxu0 %v1057
        %1187 = vmatprep.subr.bf16.mxu0 %v1060
        %1188 = vmatpush1.bf16.msra.mxu0 %v1059
        %1189 = vmatprep.subr.bf16.mxu0 %v1062
        %1190 = vmatpush1.bf16.msra.mxu0 %v1061
        %1191 = vmatprep.subr.bf16.mxu0 %v1064
        %1192 = vmatpush1.bf16.msra.mxu0 %v1063
        %1193 = vmatprep.subr.bf16.mxu0 %v1066
        %1194 = vmatpush1.bf16.msra.mxu0 %v1065
        %1195 = vmatprep.subr.bf16.mxu0 %v1068
        %1196 = vmatpush1.bf16.msra.mxu0 %v1067
        %1197 = vmatprep.subr.bf16.mxu0 %v1070
        %1198 = vmatpush1.bf16.msra.mxu0 %v1069
        %1199 = vmatprep.subr.bf16.mxu0 %v1072
        %1200 = vmatpush1.bf16.msra.mxu0 %v1071
        %1201 = vmatprep.subr.bf16.mxu0 %v1074
        %1202 = vmatpush1.bf16.msra.mxu0 %v1073
        %1203 = vmatprep.subr.bf16.mxu0 %v1076
        %1204 = vmatpush1.bf16.msra.mxu0 %v1075
        %1205 = vmatprep.subr.bf16.mxu0 %v1078
        %1206 = vmatpush1.bf16.msra.mxu0 %v1077
        %1207 = vmatprep.subr.bf16.mxu0 %v1080
        %1208 = vmatpush1.bf16.msra.mxu0 %v1079
        %1209 = vmatprep.subr.bf16.mxu0 %v1082
        %1210 = vmatpush1.bf16.msra.mxu0 %v1081
        %1211 = vmatprep.subr.bf16.mxu0 %v1084
        %1212 = vmatpush1.bf16.msra.mxu0 %v1083
        %1213 = vmatprep.mubr.bf16.mxu0 %v782
        %1214 = vmatmul.mubr.bf16.gmra.mrb[0].mxu0 %v781
        %v1215 = vpop.f32.mrb[0].mxu0
        %v1216 = vadd.f32 %v854, %v1215
        %v1217 = vpop.f32.mrb[0].mxu0
        %v1218 = vadd.f32 %v858, %v1217
        %v1219 = vpop.f32.mrb[0].mxu0
        %v1220 = vadd.f32 %v854, %v1219
        %v1221 = vpop.f32.mrb[0].mxu0
        %v1222 = vadd.f32 %v858, %v1221
        %1223 = vdwg.mxu0
        %1224 = vmatprep.subr.bf16.mxu0 %v1086
        %1225 = vmatpush1.bf16.msra.mxu0 %v1085
        %1226 = vmatprep.subr.bf16.mxu0 %v1088
        %1227 = vmatpush1.bf16.msra.mxu0 %v1087
        %1228 = vmatprep.subr.bf16.mxu0 %v1090
        %1229 = vmatpush1.bf16.msra.mxu0 %v1089
        %1230 = vmatprep.subr.bf16.mxu0 %v1092
        %1231 = vmatpush1.bf16.msra.mxu0 %v1091
        %1232 = vmatprep.subr.bf16.mxu0 %v1094
        %1233 = vmatpush1.bf16.msra.mxu0 %v1093
        %1234 = vmatprep.subr.bf16.mxu0 %v1096
        %1235 = vmatpush1.bf16.msra.mxu0 %v1095
        %1236 = vmatprep.subr.bf16.mxu0 %v1098
        %1237 = vmatpush1.bf16.msra.mxu0 %v1097
        %1238 = vmatprep.subr.bf16.mxu0 %v1100
        %1239 = vmatpush1.bf16.msra.mxu0 %v1099
        %1240 = vmatprep.subr.bf16.mxu0 %v1102
        %1241 = vmatpush1.bf16.msra.mxu0 %v1101
        %1242 = vmatprep.subr.bf16.mxu0 %v1104
        %1243 = vmatpush1.bf16.msra.mxu0 %v1103
        %1244 = vmatprep.subr.bf16.mxu0 %v1106
        %1245 = vmatpush1.bf16.msra.mxu0 %v1105
        %1246 = vmatprep.subr.bf16.mxu0 %v1108
        %1247 = vmatpush1.bf16.msra.mxu0 %v1107
        %1248 = vmatprep.subr.bf16.mxu0 %v1110
        %1249 = vmatpush1.bf16.msra.mxu0 %v1109
        %1250 = vmatprep.subr.bf16.mxu0 %v1112
        %1251 = vmatpush1.bf16.msra.mxu0 %v1111
        %1252 = vmatprep.subr.bf16.mxu0 %v1114
        %1253 = vmatpush1.bf16.msra.mxu0 %v1113
        %1254 = vmatprep.subr.bf16.mxu0 %v1116
        %1255 = vmatpush1.bf16.msra.mxu0 %v1115
        %1256 = vmatprep.mubr.bf16.mxu0 %v784
        %1257 = vmatmul.mubr.bf16.gmra.mrb[0].mxu0 %v783
        %v1258 = vpop.f32.mrb[0].mxu0
        %v1259 = vadd.f32 %v1216, %v1258
        %v1260 = vpop.f32.mrb[0].mxu0
        %v1261 = vadd.f32 %v1218, %v1260
        %v1262 = vpop.f32.mrb[0].mxu0
        %v1263 = vadd.f32 %v1220, %v1262
        %v1264 = vpop.f32.mrb[0].mxu0
        %v1265 = vadd.f32 %v1222, %v1264
        %1266 = vdwg.mxu0
        %v1267 = vmax.f32 %v1259, 0.0
        %v1268 = vmax.f32 %v1261, 0.0
        %v1269 = vmax.f32 %v1263, 0.0
        %v1270 = vmax.f32 %v1265, 0.0
        %v1271 = vpack.c.bf16 %v1269, %v1267
        %v1272 = vpack.c.bf16 %v1270, %v1268
        %v1273 = vunpack.c.l.bf16 %v1271
        %v1274 = vunpack.c.l.bf16 %v1272
        %v1275 = vunpack.c.h.bf16 %v1271
        %v1276 = vunpack.c.h.bf16 %v1272
        %v1277 = vld [vmem:[%s3] sm:$0x3]
        %v1278 = vunpack.c.l.bf16 %v1277
        %v1280 = vlaneseq
        %v1281 = vshrl.u32 %v1280, 7
        %v1282 = vsub.s32 0, %v1281
        %v1283 = vrot.slane %v1278, %v1282
        %v1284 = vlaneseq
        %v1285 = vshrl.u32 %v1284, 7
        %v1286 = vsub.s32 2, %v1285
        %v1287 = vrot.slane %v1278, %v1286
        %v1290 = vlaneseq
        %v1291 = vshrl.u32 %v1290, 7
        %v1292 = vsub.s32 0, %v1291
        %v1293 = vrot.slane %v1283, %v1292
        %v1294 = vlaneseq
        %v1295 = vshrl.u32 %v1294, 7
        %v1296 = vsub.s32 0, %v1295
        %v1297 = vrot.slane %v1287, %v1296
        %v1298 = vmul.f32 %v1273, %v1293
        %v1299 = vmul.f32 %v1274, %v1297
        %v1300 = vmul.f32 %v1275, %v1293
        %v1301 = vmul.f32 %v1276, %v1297
        %v1302 = vadd.f32 %v1298, %v1299
        %1303 = vadd.xlane.f32.xlu0 %v1302
        %v1304 = vpop.xlane.xlu0 %1303
        %v1305 = vadd.f32 %v1300, %v1301
        %1306 = vadd.xlane.f32.xlu0 %v1305
        %v1307 = vpop.xlane.xlu0 %1306
        %v1308 = vld [vmem:[%s4 + $0x6] sm:$0x1]
        %v1310 = vlaneseq
        %v1311 = vshrl.u32 %v1310, 7
        %v1312 = vsub.s32 0, %v1311
        %v1313 = vrot.slane %v1308, %v1312
        %v1315 = vadd.f32 %v1304, %v1313
        %v1316 = vadd.f32 %v1307, %v1313
        %v1317 = vxor.u32 %v1315, 2147483648
        %v1318 = vxor.u32 %v1316, 2147483648
        %v1319 = vmul.f32 %v1317, 1.442695
        %v1320 = vpow.pop %v1319
        %v1321 = vmul.f32 %v1318, 1.442695
        %v1322 = vpow.pop %v1321
        %v1323 = vadd.f32 %v1320, 1.0
        %v1324 = vadd.f32 %v1322, 1.0
        %v1325 = vrcp.pop %v1323
        %v1326 = vmul.f32 1.0, %v1325
        %v1327 = vrcp.pop %v1324
        %v1328 = vmul.f32 1.0, %v1327
        %1329 = vst [vmem:[%s272] sm:$0xff] %v1326
        %1330 = vst [vmem:[%s272 + $0x8] sm:$0xff] %v1328
        %s1331 = sand.u32 %s141, 1
        %s1332 = scalar_lea.sflag [#allocation4], %s1331
        %s1333 = sand.u32 %s141, 1
        %s1334 = smul.addr %s1333, 16
        %s1335 = scalar_lea.vmem [#allocation8], %s1334
        // Predicated region
        $region53: #{tpu_custom_call.1} parent=39 // pred_check
          %p1336 = pneg %p151
        $region54: #{tpu_custom_call.1} parent=39 // pred_check_branch
          %1338 = sbr.rel (%p1336) target = $region56
        $region55: #{tpu_custom_call.1} parent=39 // pred_region
          %s1339 = smul.u32 2, %s23
          %s1341 = ssub.s32 256, 256
          %1342 = vsyncadd %s1332, %s1341
          %s1343 = smul.addr %s1339, 128
          %s1344 = scalar_lea.hbm %s5, %s1343
          %s1345 = sshll.u32 %s1335, 4
          %s1346 = int_to_ptr.vmem [resolvable:$true] %s1345
          %1351 = dma.vmem_to_hbm [thread:$0]  %s1346, 256, %s1344, %s1332, 128, 128, 8
        $region56: #{tpu_custom_call.1} parent=39 // pred_fallthru
          _
      $region40: #{tpu_custom_call.1} parent=5 // pred_fallthru
        _
      %p1352 = scmp.le.s32.totalorder 2, %s18
      // Predicated region
      $region57: #{tpu_custom_call.1} parent=5 // pred_check
        %p1353 = pneg %p1352
      $region58: #{tpu_custom_call.1} parent=5 // pred_check_branch
        %1355 = sbr.rel (%p1353) target = $region60
      $region59: #{tpu_custom_call.1} parent=5 // pred_region
        %s1356 = ssub.s32 %s18, 2
        // Predicated region
        $region61: #{tpu_custom_call.1} parent=59 // pred_check
          %p1357 = pneg %p157
        $region62: #{tpu_custom_call.1} parent=59 // pred_check_branch
          %1359 = sbr.rel (%p1357) target = $region64
        $region63: #{tpu_custom_call.1} parent=59 // pred_region
          %s1360 = sand.u32 %s142, 1
          %s1361 = scalar_lea.sflag [#allocation4], %s1360
          %s1362 = sand.u32 %s142, 1
          %s1363 = smul.addr %s1362, 16
          %s1364 = scalar_lea.vmem [#allocation8], %s1363
          %1365 = dma.done %s1361, 256
        $region64: #{tpu_custom_call.1} parent=59 // pred_fallthru
          _
      $region60: #{tpu_custom_call.1} parent=5 // pred_fallthru
        _
    $region6: #{tpu_custom_call.1} parent=1 // loop_footer
      %s22 = sadd.s32 1, %s18
    $region7: #{tpu_custom_call.1} parent=1 // loop_footer_branch
      %17 = sbr.rel target = $region3
    $region8: #{tpu_custom_call.1} parent=1 // loop_exit
      _
    %1366 = vsyncpa [#allocation3], 1
    %s1367 = scalar_lea.sflag [#allocation3], 1
    %1368 = vsyncpa %s1367, 1
    %1369 = vsyncpa [#allocation6], 1
    %1370 = vsyncpa [#allocation4], 1
    %s1371 = scalar_lea.sflag [#allocation4], 1
    %1372 = vsyncpa %s1371, 1

</llo_original>
